<compile_context>
chip_gen: v6e
topology: v6e:2x2x1
jax: 0.10.0
libtpu: 0.0.40
codegen_flags: <defaults>
</compile_context>

<pallas_src>
import functools

import jax
import jax.numpy as jnp
from jax.experimental import pallas as pl
from jax.experimental.pallas import tpu as pltpu


def block_kernel(xcol_ref, w_ref, b_ref, gamma_ref, beta_ref, o_ref,
                 *, groups, eps):
    """One batch element per grid step.

    xcol_ref : (1, 9*Cin, HW)  im2col'd input (HW on the lane axis)
    w_ref    : (Cout, 9*Cin)   fused conv weight
    b_ref, gamma_ref, beta_ref : (Cout, 1)
    o_ref    : (1, Cout, HW)   lane-dense output
    """
    Cout = w_ref.shape[0]
    HW = xcol_ref.shape[2]
    cpg = Cout // groups

    # ---- 3x3 conv as ONE fused im2col matmul on the MXU ----
    acc = jnp.dot(w_ref[...], xcol_ref[0],
                  preferred_element_type=jnp.float32)          # (Cout, HW)
    acc = acc + b_ref[...]                                     # bias broadcast

    # ---- GroupNorm (per image): reshape-based group reductions ----
    sum_c = jnp.sum(acc, axis=1, keepdims=True)                # (Cout, 1)
    sumsq_c = jnp.sum(acc * acc, axis=1, keepdims=True)        # (Cout, 1)
    if cpg == 1:
        g_sum, g_sumsq = sum_c, sumsq_c
    else:
        g_sum = jnp.sum(sum_c.reshape(groups, cpg), axis=1, keepdims=True)
        g_sumsq = jnp.sum(sumsq_c.reshape(groups, cpg), axis=1, keepdims=True)

    count = float(cpg * HW)
    g_mean = g_sum / count                                     # (groups, 1)
    # clamp: E[x^2]-E[x]^2 can go slightly negative from f32 cancellation
    g_var = jnp.maximum(g_sumsq / count - g_mean * g_mean, 0.0)
    g_inv = jax.lax.rsqrt(g_var + eps)                         # (groups, 1)

    if cpg == 1:
        mean_c, inv_c = g_mean, g_inv
    else:
        mean_c = jnp.broadcast_to(
            g_mean[:, None, :], (groups, cpg, 1)).reshape(Cout, 1)
        inv_c = jnp.broadcast_to(
            g_inv[:, None, :], (groups, cpg, 1)).reshape(Cout, 1)

    y = (acc - mean_c) * (inv_c * gamma_ref[...]) + beta_ref[...]

    # ---- Mish with a single transcendental ----
    # mish(y) = y * tanh(softplus(y)); with e = exp(y):
    #   tanh(log1p(e)) = e*(e+2) / (e*(e+2) + 2)
    # For y > 20 (torch softplus threshold) tanh(softplus(y)) == 1 in f32.
    e = jnp.exp(jnp.minimum(y, 20.0))
    t = e * (e + 2.0)
    mish = y * t * pl.reciprocal(t + 2.0, approx=True)
    out = jnp.where(y > 20.0, y, mish)

    o_ref[0] = out.astype(o_ref.dtype)


def block_forward(x, w, b, gamma, beta, *, groups=8, eps=1e-5):
    """x: (N, Cin, H, W) NCHW; w: (Cout, Cin, 3, 3); b/gamma/beta: (Cout,)."""
    N, Cin, H, W = x.shape
    Cout = w.shape[0]
    assert Cout % groups == 0, "GroupNorm requires dim_out % groups == 0"
    HW = H * W

    # Layout glue in XLA (done once, outside the kernel):
    # zero-pad + im2col -> lane-dense (N, 9*Cin, H*W) operand.
    xp = jnp.pad(x, ((0, 0), (0, 0), (1, 1), (1, 1)))
    patches = jnp.stack(
        [xp[:, :, dy:dy + H, dx:dx + W]
         for dy in range(3) for dx in range(3)], axis=1)    # (N, 9, Cin, H, W)
    xcol = patches.reshape(N, 9 * Cin, HW)

    # Fused weight: w_fused[cout, (dy*3+dx)*Cin + cin] = w[cout, cin, dy, dx]
    w_fused = jnp.transpose(w, (0, 2, 3, 1)).reshape(Cout, 9 * Cin)
    b2 = b.reshape(Cout, 1)
    g2 = gamma.reshape(Cout, 1)
    be2 = beta.reshape(Cout, 1)

    kernel = functools.partial(block_kernel, groups=groups, eps=eps)
    out_flat = pl.pallas_call(
        kernel,
        out_shape=jax.ShapeDtypeStruct((N, Cout, HW), x.dtype),
        grid_spec=pltpu.PrefetchScalarGridSpec(
            num_scalar_prefetch=0,
            grid=(N,),
            in_specs=[
                pl.BlockSpec((1, 9 * Cin, HW), lambda n: (n, 0, 0)),
                pl.BlockSpec((Cout, 9 * Cin), lambda n: (0, 0)),
                pl.BlockSpec((Cout, 1), lambda n: (0, 0)),
                pl.BlockSpec((Cout, 1), lambda n: (0, 0)),
                pl.BlockSpec((Cout, 1), lambda n: (0, 0)),
            ],
            out_specs=pl.BlockSpec((1, Cout, HW), lambda n: (n, 0, 0)),
        ),
        compiler_params=pltpu.CompilerParams(
            dimension_semantics=("parallel",)),
    )(xcol, w_fused, b2, g2, be2)

    return out_flat.reshape(N, Cout, H, W)


def ref_forward(x, w, b, gamma, beta, *, groups=8, eps=1e-5):
    """Plain-JAX reference matching PyTorch Block semantics."""
    y = jax.lax.conv_general_dilated(
        x, w, window_strides=(1, 1), padding=((1, 1), (1, 1)),
        dimension_numbers=('NCHW', 'OIHW', 'NCHW'))
    y = y + b[None, :, None, None]
    N, C, H, W = y.shape
    yg = y.reshape(N, groups, C // groups, H, W)
    mean = yg.mean(axis=(2, 3, 4), keepdims=True)
    var = yg.var(axis=(2, 3, 4), keepdims=True)
    yn = ((yg - mean) / jnp.sqrt(var + eps)).reshape(N, C, H, W)
    yn = yn * gamma[None, :, None, None] + beta[None, :, None, None]
    sp = jnp.where(yn > 20.0, yn, jnp.log1p(jnp.exp(jnp.minimum(yn, 20.0))))
    return yn * jnp.tanh(sp)


if __name__ == "__main__":
    # Small shapes consistent with Block(dim=4, dim_out=8, groups=8)
    N, Cin, Cout, H, W, groups = 2, 4, 8, 16, 16, 8

    key = jax.random.PRNGKey(0)
    kx, kw, kb, kg, kbe = jax.random.split(key, 5)
    x = jax.random.normal(kx, (N, Cin, H, W), dtype=jnp.float32)
    # deterministic synthetic parameters (Conv2d weight/bias, GroupNorm affine)
    w = 0.2 * jax.random.normal(kw, (Cout, Cin, 3, 3), dtype=jnp.float32)
    b = 0.1 * jax.random.normal(kb, (Cout,), dtype=jnp.float32)
    gamma = 1.0 + 0.1 * jax.random.normal(kg, (Cout,), dtype=jnp.float32)
    beta = 0.1 * jax.random.normal(kbe, (Cout,), dtype=jnp.float32)

    out = block_forward(x, w, b, gamma, beta, groups=groups)
    out = jax.block_until_ready(out)

    ref = jax.block_until_ready(ref_forward(x, w, b, gamma, beta, groups=groups))
    assert out.shape == (N, Cout, H, W)
    # Tolerance accounts for default (bf16-operand) MXU precision and the
    # approx EUP reciprocal in the fused Mish.
    assert jnp.allclose(out, ref, atol=2e-2, rtol=2e-2), \
        f"max abs err {jnp.max(jnp.abs(out - ref))}"

    print("KERNEL_OK")
</pallas_src>

<mosaic_0001>
module attributes {stable_mosaic.version = 11 : i64} {
  func.func @block_kernel(%arg0: i32, %arg1: memref<1x36x256xf32, #tpu.memory_space<vmem>>, %arg2: memref<8x36xf32, #tpu.memory_space<vmem>>, %arg3: memref<8x1xf32, #tpu.memory_space<vmem>>, %arg4: memref<8x1xf32, #tpu.memory_space<vmem>>, %arg5: memref<8x1xf32, #tpu.memory_space<vmem>>, %arg6: memref<1x8x256xf32, #tpu.memory_space<vmem>>) attributes {dimension_semantics = [#tpu.dimension_semantics<parallel>], iteration_bounds = array<i64: 2>, scalar_prefetch = 0 : i64, scratch_operands = 0 : i64, tpu.core_type = #tpu.core_type<tc>, window_params = [{transform_indices = @transform_0, window_bounds = array<i64: 1, 36, 256>}, {pipeline_mode = #tpu.pipeline_mode<synchronous>, transform_indices = @transform_1, window_bounds = array<i64: 8, 36>}, {pipeline_mode = #tpu.pipeline_mode<synchronous>, transform_indices = @transform_2, window_bounds = array<i64: 8, 1>}, {pipeline_mode = #tpu.pipeline_mode<synchronous>, transform_indices = @transform_3, window_bounds = array<i64: 8, 1>}, {pipeline_mode = #tpu.pipeline_mode<synchronous>, transform_indices = @transform_4, window_bounds = array<i64: 8, 1>}, {transform_indices = @transform_5, window_bounds = array<i64: 1, 8, 256>}]} {
    %c0 = arith.constant 0 : index
    %c0_0 = arith.constant 0 : index
    %0 = vector.load %arg2[%c0, %c0_0] : memref<8x36xf32, #tpu.memory_space<vmem>>, vector<8x36xf32>
    %c0_1 = arith.constant 0 : index
    %c0_2 = arith.constant 0 : index
    %c0_3 = arith.constant 0 : index
    %1 = vector.load %arg1[%c0_1, %c0_2, %c0_3] : memref<1x36x256xf32, #tpu.memory_space<vmem>>, vector<1x36x256xf32>
    %2 = vector.shape_cast %1 : vector<1x36x256xf32> to vector<36x256xf32>
    %cst = arith.constant dense<0.000000e+00> : vector<8x256xf32>
    %3 = tpu.matmul %0, %2, %cst {dimension_numbers = #tpu.dot_dimension_numbers<[1], [0], [0], [1], [0, 0, 1, 1], [], []>} : vector<8x36xf32>, vector<36x256xf32>, vector<8x256xf32> -> vector<8x256xf32>
    %c0_4 = arith.constant 0 : index
    %c0_5 = arith.constant 0 : index
    %4 = vector.load %arg3[%c0_4, %c0_5] : memref<8x1xf32, #tpu.memory_space<vmem>>, vector<8x1xf32>
    %5 = vector.broadcast %4 : vector<8x1xf32> to vector<8x256xf32>
    %6 = arith.addf %3, %5 : vector<8x256xf32>
    %cst_6 = arith.constant dense<0.000000e+00> : vector<8xf32>
    %7 = vector.multi_reduction <add>, %6, %cst_6 [1] : vector<8x256xf32> to vector<8xf32>
    %8 = vector.shape_cast %7 : vector<8xf32> to vector<8x1xf32>
    %9 = arith.mulf %6, %6 : vector<8x256xf32>
    %cst_7 = arith.constant dense<0.000000e+00> : vector<8xf32>
    %10 = vector.multi_reduction <add>, %9, %cst_7 [1] : vector<8x256xf32> to vector<8xf32>
    %11 = vector.shape_cast %10 : vector<8xf32> to vector<8x1xf32>
    %cst_8 = arith.constant 2.560000e+02 : f32
    %12 = vector.broadcast %cst_8 : f32 to vector<8x1xf32>
    %13 = arith.divf %8, %12 : vector<8x1xf32>
    %cst_9 = arith.constant 2.560000e+02 : f32
    %14 = vector.broadcast %cst_9 : f32 to vector<8x1xf32>
    %15 = arith.divf %11, %14 : vector<8x1xf32>
    %16 = arith.mulf %13, %13 : vector<8x1xf32>
    %17 = arith.subf %15, %16 : vector<8x1xf32>
    %cst_10 = arith.constant 0.000000e+00 : f32
    %18 = vector.broadcast %cst_10 : f32 to vector<8x1xf32>
    %19 = arith.maximumf %17, %18 : vector<8x1xf32>
    %cst_11 = arith.constant 9.99999974E-6 : f32
    %20 = vector.broadcast %cst_11 : f32 to vector<8x1xf32>
    %21 = arith.addf %19, %20 : vector<8x1xf32>
    %22 = math.rsqrt %21 : vector<8x1xf32>
    %23 = vector.broadcast %13 : vector<8x1xf32> to vector<8x256xf32>
    %24 = arith.subf %6, %23 : vector<8x256xf32>
    %c0_12 = arith.constant 0 : index
    %c0_13 = arith.constant 0 : index
    %25 = vector.load %arg4[%c0_12, %c0_13] : memref<8x1xf32, #tpu.memory_space<vmem>>, vector<8x1xf32>
    %26 = arith.mulf %22, %25 : vector<8x1xf32>
    %27 = vector.broadcast %26 : vector<8x1xf32> to vector<8x256xf32>
    %28 = arith.mulf %24, %27 : vector<8x256xf32>
    %c0_14 = arith.constant 0 : index
    %c0_15 = arith.constant 0 : index
    %29 = vector.load %arg5[%c0_14, %c0_15] : memref<8x1xf32, #tpu.memory_space<vmem>>, vector<8x1xf32>
    %30 = vector.broadcast %29 : vector<8x1xf32> to vector<8x256xf32>
    %31 = arith.addf %28, %30 : vector<8x256xf32>
    %cst_16 = arith.constant 2.000000e+01 : f32
    %32 = vector.broadcast %cst_16 : f32 to vector<8x256xf32>
    %33 = arith.minimumf %31, %32 : vector<8x256xf32>
    %34 = math.exp %33 : vector<8x256xf32>
    %cst_17 = arith.constant 2.000000e+00 : f32
    %35 = vector.broadcast %cst_17 : f32 to vector<8x256xf32>
    %36 = arith.addf %34, %35 : vector<8x256xf32>
    %37 = arith.mulf %34, %36 : vector<8x256xf32>
    %38 = arith.mulf %31, %37 : vector<8x256xf32>
    %cst_18 = arith.constant 2.000000e+00 : f32
    %39 = vector.broadcast %cst_18 : f32 to vector<8x256xf32>
    %40 = arith.addf %37, %39 : vector<8x256xf32>
    %41 = tpu.reciprocal %40 {approx = true} : vector<8x256xf32> -> vector<8x256xf32>
    %42 = arith.mulf %38, %41 : vector<8x256xf32>
    %cst_19 = arith.constant 2.000000e+01 : f32
    %43 = vector.broadcast %cst_19 : f32 to vector<8x256xf32>
    %44 = arith.cmpf ogt, %31, %43 : vector<8x256xf32>
    %45 = arith.select %44, %31, %42 : vector<8x256xi1>, vector<8x256xf32>
    %c0_20 = arith.constant 0 : index
    %c0_21 = arith.constant 0 : index
    %c0_22 = arith.constant 0 : index
    %46 = vector.load %arg6[%c0_20, %c0_21, %c0_22] : memref<1x8x256xf32, #tpu.memory_space<vmem>>, vector<1x8x256xf32>
    %47 = vector.shape_cast %46 : vector<1x8x256xf32> to vector<8x256xf32>
    %48 = vector.shape_cast %45 : vector<8x256xf32> to vector<1x8x256xf32>
    tpu.vector_store %arg6[%c0_20, %c0_21, %c0_22], %48 {strides = array<i32>} : memref<1x8x256xf32, #tpu.memory_space<vmem>>, vector<1x8x256xf32>,
    return
  }
  func.func @transform_0(%arg0: i32) -> (i32, i32, i32) {
    %c0_i32 = arith.constant 0 : i32
    %c0_i32_0 = arith.constant 0 : i32
    %c0_i32_1 = arith.constant 0 : i32
    return %arg0, %c0_i32, %c0_i32_0 : i32, i32, i32
  }
  func.func @transform_1(%arg0: i32) -> (i32, i32) {
    %c0_i32 = arith.constant 0 : i32
    %c0_i32_0 = arith.constant 0 : i32
    %c0_i32_1 = arith.constant 0 : i32
    return %c0_i32, %c0_i32_0 : i32, i32
  }
  func.func @transform_2(%arg0: i32) -> (i32, i32) {
    %c0_i32 = arith.constant 0 : i32
    %c0_i32_0 = arith.constant 0 : i32
    %c0_i32_1 = arith.constant 0 : i32
    return %c0_i32, %c0_i32_0 : i32, i32
  }
  func.func @transform_3(%arg0: i32) -> (i32, i32) {
    %c0_i32 = arith.constant 0 : i32
    %c0_i32_0 = arith.constant 0 : i32
    %c0_i32_1 = arith.constant 0 : i32
    return %c0_i32, %c0_i32_0 : i32, i32
  }
  func.func @transform_4(%arg0: i32) -> (i32, i32) {
    %c0_i32 = arith.constant 0 : i32
    %c0_i32_0 = arith.constant 0 : i32
    %c0_i32_1 = arith.constant 0 : i32
    return %c0_i32, %c0_i32_0 : i32, i32
  }
  func.func @transform_5(%arg0: i32) -> (i32, i32, i32) {
    %c0_i32 = arith.constant 0 : i32
    %c0_i32_0 = arith.constant 0 : i32
    %c0_i32_1 = arith.constant 0 : i32
    return %arg0, %c0_i32, %c0_i32_0 : i32, i32, i32
  }
}

</mosaic_0001>

<llo_original>
// kernel: tpu_custom_call.1
$region0: #{tpu_custom_call.1}
  #allocation0 [shape = 'u32[]', space=smem, size = 0x4, offset = 0x4, fixed_abs, tag = 'smem constant byte address 0x4 - core index']
  #allocation1 [shape = 'u32[144,128]{1,0:T(1,128)}', space=vmem, size = 0x12000, scoped, tag = 'internal scratch']
  %s0 = inlined_call_operand.vmem [shape: f32[2,36,256], index: 0, kind: input, shape index: {}]
  %s1 = inlined_call_operand.vmem [shape: f32[8,36], index: 1, kind: input, shape index: {}]
  %s2 = inlined_call_operand.vmem [shape: f32[8,1], index: 2, kind: input, shape index: {}]
  %s3 = inlined_call_operand.vmem [shape: f32[8,1], index: 3, kind: input, shape index: {}]
  %s4 = inlined_call_operand.vmem [shape: f32[8,1], index: 4, kind: input, shape index: {}]
  %s5 = inlined_call_operand.hbm [shape: f32[2,8,256], index: 5, kind: output, shape index: {}]
  %s6 = sld [smem:[#allocation0]]
  $region53: #{tpu_custom_call.1} parent=0
    _
  %s8 = ssub.s32 1, %s6
  %s9 = scalar_select 0, %s8, %s6
  $region1: #{tpu_custom_call.1} parent=0
    #allocation2 [shape = 'u8[16384]{0}', space=vmem, size = 0x4000, scoped, tag = 'output window, operand 0']
    #allocation3 [shape = 's32[2]{0}', space=sflag, size = 0x8, scoped, tag = 'scoped memory for tpu_custom_call.1']
    %10 = vsyncpa [#allocation3], 0
    %s11 = scalar_lea.sflag [#allocation3], 1
    %12 = vsyncpa %s11, 0
    loop: start=0, step=1, limit=4
    $region2: #{tpu_custom_call.1} parent=1 // loop_pre_header
      _
    $region3: #{tpu_custom_call.1} parent=1 // loop_header
      %s14 = sphi 0, %s18
      %p15 = scmp.ge.s32.totalorder %s14, 4
      %s24 = sphi 0, %s26
      %s27 = sphi 0, %s24
      %s28 = sphi 0, %s27
      %s44 = sphi 0, %s28
      %s48 = sphi 0, %s48
      %s50 = sphi 0, %s48
      %s51 = sphi 0, %s50
      %s65 = sphi 0, %s51
      %s69 = sphi 0, %s69
      %s71 = sphi 0, %s69
      %s72 = sphi 0, %s71
      %s86 = sphi 0, %s72
      %s90 = sphi 0, %s90
      %s92 = sphi 0, %s90
      %s93 = sphi 0, %s92
      %s107 = sphi 0, %s93
      %s111 = sphi 0, %s111
      %s113 = sphi 0, %s111
      %s114 = sphi 0, %s113
      %s128 = sphi 0, %s114
      %s134 = sphi 0, %s136
      %s137 = sphi 0, %s134
      %s138 = sphi 0, %s137
      %s154 = sphi 0, %s138
    $region4: #{tpu_custom_call.1} parent=1 // loop_header_branch
      %17 = sbr.rel (%p15) target = $region8
    $region5: #{tpu_custom_call.1} parent=1 // loop_body
      %s19 = ssub.s32 %s14, 1
      %s20 = ssub.s32 %s14, 2
      %s21 = sadd.s32 %s14, 1
      %s22 = ssub.s32 %s14, %s21
      %p23 = scmp.eq.s32.totalorder %s22, 0
      %s25 = sadd.s32 %s24, 1
      %s26 = scalar_select %p23, %s24, %s25
      %p29 = pneg %p23
      %p30 = scmp.eq.s32.totalorder %s14, 1
      %p31 = por %p29, %p30
      %p32 = scmp.ne.s32.totalorder %s24, %s27
      %p33 = scmp.eq.s32.totalorder %s14, 0
      %p34 = por %p32, %p33
      %p35 = scmp.ne.s32.totalorder %s24, %s27
      %p36 = scmp.eq.s32.totalorder %s19, 1
      %p37 = por %p35, %p36
      %p38 = scmp.ne.s32.totalorder %s27, %s28
      %p39 = scmp.eq.s32.totalorder %s19, 0
      %p40 = por %p38, %p39
      %p41 = scmp.ne.s32.totalorder %s27, %s28
      %p42 = scmp.eq.s32.totalorder %s20, 1
      %p43 = por %p41, %p42
      %p45 = scmp.ne.s32.totalorder %s28, %s44
      %p46 = scmp.eq.s32.totalorder %s20, 0
      %p47 = por %p45, %p46
      %s49 = sadd.s32 %s48, 1
      %p52 = scmp.eq.s32.totalorder %s14, 1
      %p53 = scmp.ne.s32.totalorder %s48, %s50
      %p54 = scmp.eq.s32.totalorder %s14, 0
      %p55 = por %p53, %p54
      %p56 = scmp.ne.s32.totalorder %s48, %s50
      %p57 = scmp.eq.s32.totalorder %s19, 1
      %p58 = por %p56, %p57
      %p59 = scmp.ne.s32.totalorder %s50, %s51
      %p60 = scmp.eq.s32.totalorder %s19, 0
      %p61 = por %p59, %p60
      %p62 = scmp.ne.s32.totalorder %s50, %s51
      %p63 = scmp.eq.s32.totalorder %s20, 1
      %p64 = por %p62, %p63
      %p66 = scmp.ne.s32.totalorder %s51, %s65
      %p67 = scmp.eq.s32.totalorder %s20, 0
      %p68 = por %p66, %p67
      %s70 = sadd.s32 %s69, 1
      %p73 = scmp.eq.s32.totalorder %s14, 1
      %p74 = scmp.ne.s32.totalorder %s69, %s71
      %p75 = scmp.eq.s32.totalorder %s14, 0
      %p76 = por %p74, %p75
      %p77 = scmp.ne.s32.totalorder %s69, %s71
      %p78 = scmp.eq.s32.totalorder %s19, 1
      %p79 = por %p77, %p78
      %p80 = scmp.ne.s32.totalorder %s71, %s72
      %p81 = scmp.eq.s32.totalorder %s19, 0
      %p82 = por %p80, %p81
      %p83 = scmp.ne.s32.totalorder %s71, %s72
      %p84 = scmp.eq.s32.totalorder %s20, 1
      %p85 = por %p83, %p84
      %p87 = scmp.ne.s32.totalorder %s72, %s86
      %p88 = scmp.eq.s32.totalorder %s20, 0
      %p89 = por %p87, %p88
      %s91 = sadd.s32 %s90, 1
      %p94 = scmp.eq.s32.totalorder %s14, 1
      %p95 = scmp.ne.s32.totalorder %s90, %s92
      %p96 = scmp.eq.s32.totalorder %s14, 0
      %p97 = por %p95, %p96
      %p98 = scmp.ne.s32.totalorder %s90, %s92
      %p99 = scmp.eq.s32.totalorder %s19, 1
      %p100 = por %p98, %p99
      %p101 = scmp.ne.s32.totalorder %s92, %s93
      %p102 = scmp.eq.s32.totalorder %s19, 0
      %p103 = por %p101, %p102
      %p104 = scmp.ne.s32.totalorder %s92, %s93
      %p105 = scmp.eq.s32.totalorder %s20, 1
      %p106 = por %p104, %p105
      %p108 = scmp.ne.s32.totalorder %s93, %s107
      %p109 = scmp.eq.s32.totalorder %s20, 0
      %p110 = por %p108, %p109
      %s112 = sadd.s32 %s111, 1
      %p115 = scmp.eq.s32.totalorder %s14, 1
      %p116 = scmp.ne.s32.totalorder %s111, %s113
      %p117 = scmp.eq.s32.totalorder %s14, 0
      %p118 = por %p116, %p117
      %p119 = scmp.ne.s32.totalorder %s111, %s113
      %p120 = scmp.eq.s32.totalorder %s19, 1
      %p121 = por %p119, %p120
      %p122 = scmp.ne.s32.totalorder %s113, %s114
      %p123 = scmp.eq.s32.totalorder %s19, 0
      %p124 = por %p122, %p123
      %p125 = scmp.ne.s32.totalorder %s113, %s114
      %p126 = scmp.eq.s32.totalorder %s20, 1
      %p127 = por %p125, %p126
      %p129 = scmp.ne.s32.totalorder %s114, %s128
      %p130 = scmp.eq.s32.totalorder %s20, 0
      %p131 = por %p129, %p130
      %s132 = ssub.s32 %s14, %s21
      %p133 = scmp.eq.s32.totalorder %s132, 0
      %s135 = sadd.s32 %s134, 1
      %s136 = scalar_select %p133, %s134, %s135
      %p139 = pneg %p133
      %p140 = scmp.eq.s32.totalorder %s14, 1
      %p141 = por %p139, %p140
      %p142 = scmp.ne.s32.totalorder %s134, %s137
      %p143 = scmp.eq.s32.totalorder %s14, 0
      %p144 = por %p142, %p143
      %p145 = scmp.ne.s32.totalorder %s134, %s137
      %p146 = scmp.eq.s32.totalorder %s19, 1
      %p147 = por %p145, %p146
      %p148 = scmp.ne.s32.totalorder %s137, %s138
      %p149 = scmp.eq.s32.totalorder %s19, 0
      %p150 = por %p148, %p149
      %p151 = scmp.ne.s32.totalorder %s137, %s138
      %p152 = scmp.eq.s32.totalorder %s20, 1
      %p153 = por %p151, %p152
      %p155 = scmp.ne.s32.totalorder %s138, %s154
      %p156 = scmp.eq.s32.totalorder %s20, 0
      %p157 = por %p155, %p156
      %p158 = scmp.le.s32.totalorder 1, %s14
      %p159 = scmp.lt.s32.totalorder %s14, 3
      %p160 = pnand %p158, %p159
      %p161 = pneg %p160
      // Predicated region
      $region9: #{tpu_custom_call.1} parent=5 // pred_check
        _
      $region10: #{tpu_custom_call.1} parent=5 // pred_check_branch
        %163 = sbr.rel (%p160) target = $region12
      $region11: #{tpu_custom_call.1} parent=5 // pred_region
        %s164 = ssub.s32 %s14, 1
        // Predicated region
        $region13: #{tpu_custom_call.1} parent=11 // pred_check
          %p165 = pneg %p61
        $region14: #{tpu_custom_call.1} parent=11 // pred_check_branch
          %167 = sbr.rel (%p165) target = $region16
        $region15: #{tpu_custom_call.1} parent=11 // pred_region
          _
        $region16: #{tpu_custom_call.1} parent=11 // pred_fallthru
          _
        // Predicated region
        $region17: #{tpu_custom_call.1} parent=11 // pred_check
          %p168 = pneg %p82
        $region18: #{tpu_custom_call.1} parent=11 // pred_check_branch
          %170 = sbr.rel (%p168) target = $region20
        $region19: #{tpu_custom_call.1} parent=11 // pred_region
          _
        $region20: #{tpu_custom_call.1} parent=11 // pred_fallthru
          _
        // Predicated region
        $region21: #{tpu_custom_call.1} parent=11 // pred_check
          %p171 = pneg %p103
        $region22: #{tpu_custom_call.1} parent=11 // pred_check_branch
          %173 = sbr.rel (%p171) target = $region24
        $region23: #{tpu_custom_call.1} parent=11 // pred_region
          _
        $region24: #{tpu_custom_call.1} parent=11 // pred_fallthru
          _
        // Predicated region
        $region25: #{tpu_custom_call.1} parent=11 // pred_check
          %p174 = pneg %p124
        $region26: #{tpu_custom_call.1} parent=11 // pred_check_branch
          %176 = sbr.rel (%p174) target = $region28
        $region27: #{tpu_custom_call.1} parent=11 // pred_region
          _
        $region28: #{tpu_custom_call.1} parent=11 // pred_fallthru
          _
      $region12: #{tpu_custom_call.1} parent=5 // pred_fallthru
        _
      %p177 = scmp.lt.s32.totalorder %s14, 2
      // Predicated region
      $region29: #{tpu_custom_call.1} parent=5 // pred_check
        %p178 = pneg %p177
      $region30: #{tpu_custom_call.1} parent=5 // pred_check_branch
        %180 = sbr.rel (%p178) target = $region32
      $region31: #{tpu_custom_call.1} parent=5 // pred_region
        // Predicated region
        $region33: #{tpu_custom_call.1} parent=31 // pred_check
          %p181 = pneg %p34
        $region34: #{tpu_custom_call.1} parent=31 // pred_check_branch
          %183 = sbr.rel (%p181) target = $region36
        $region35: #{tpu_custom_call.1} parent=31 // pred_region
          %p184 = scmp.lt.s32.totalorder %s14, 1
          %s185 = scalar_select %p184, %s14, 1
          %s186 = smul.addr %s185, 10
          %s187 = smul.addr %s186, 8
          %s188 = scalar_lea.vmem %s0, %s187
        $region36: #{tpu_custom_call.1} parent=31 // pred_fallthru
          _
      $region32: #{tpu_custom_call.1} parent=5 // pred_fallthru
        _
      %p189 = scmp.le.s32.totalorder 1, %s14
      %p190 = scmp.lt.s32.totalorder %s14, 3
      %p191 = pnand %p189, %p190
      %p192 = pneg %p191
      // Predicated region
      $region37: #{tpu_custom_call.1} parent=5 // pred_check
        _
      $region38: #{tpu_custom_call.1} parent=5 // pred_check_branch
        %194 = sbr.rel (%p191) target = $region40
      $region39: #{tpu_custom_call.1} parent=5 // pred_region
        %s195 = ssub.s32 %s14, 1
        %p196 = scmp.lt.s32.totalorder %s19, 1
        %s197 = scalar_select %p196, %s19, 1
        %s198 = smul.addr %s197, 10
        %s199 = smul.addr %s198, 8
        %s200 = scalar_lea.vmem %s0, %s199
        %p201 = pneg %p40
        %p202 = pneg %p37
        %p203 = pneg %p61
        %p204 = pneg %p58
        %p205 = pneg %p82
        %p206 = pneg %p79
        %p207 = pneg %p103
        %p208 = pneg %p100
        %p209 = pneg %p124
        %p210 = pneg %p121
        %p211 = pneg %p150
        %p212 = pneg %p147
        %s213 = sand.u32 %s137, 1
        %s214 = scalar_lea.sflag [#allocation3], %s213
        %s215 = sand.u32 %s137, 1
        %s216 = smul.addr %s215, 16
        %s217 = scalar_lea.vmem [#allocation2], %s216
        %p218 = scmp.lt.s32.totalorder %s19, 1
        %s219 = scalar_select %p218, %s19, 1
        %s220 = smul.addr %s219, 10
        %s221 = smul.addr %s220, 8
        %s222 = scalar_lea.vmem %s0, %s221
        %v223 = vld [vmem:[%s1] sm:$0xff]
        %v224 = vld [vmem:[%s222] sm:$0xff]
        %v225 = vld [vmem:[%s222 + $0x8] sm:$0xff]
        %v226 = vld [vmem:[%s222 + $0x10] sm:$0xff]
        %v227 = vld [vmem:[%s222 + $0x18] sm:$0xff]
        %v228 = vld [vmem:[%s222 + $0x20] sm:$0xff]
        %v229 = vld [vmem:[%s222 + $0x28] sm:$0xff]
        %v230 = vld [vmem:[%s222 + $0x30] sm:$0xff]
        %v231 = vld [vmem:[%s222 + $0x38] sm:$0xff]
        %v232 = vld [vmem:[%s222 + $0x40] sm:$0xf]
        %v233 = vld [vmem:[%s222 + $0x48] sm:$0xf]
        %v234 = vld [vmem:[%s2] sm:$0xff]
        %236 = vset.pattern.permute.xlu0 0
        %237 = vperm.xlu0 %236, %v234
        %v238 = vpop.permute.xlu0 %237
        %vm240 = vcmask 293888
        %v242 = vsel %vm240, %v223, 0
        %vm244 = vcmask 1043456
        %v246 = vsel %vm244, %v232, 0
        %v249 = vsel %vm244, %v233, 0
        %251 = vmatprep.subr.mxu0 0.0
        %252 = vmatpush1.msra.mxu0 0.0
        %253 = vmatprep.subr.mxu0 0.0
        %254 = vmatpush1.msra.mxu0 0.0
        %255 = vmatprep.subr.mxu0 0.0
        %256 = vmatpush1.msra.mxu0 0.0
        %257 = vmatprep.subr.mxu0 0.0
        %258 = vmatpush1.msra.mxu0 0.0
        %259 = vmatprep.subr.mxu0 0.0
        %260 = vmatpush1.msra.mxu0 0.0
        %261 = vmatprep.subr.mxu0 0.0
        %262 = vmatpush1.msra.mxu0 0.0
        %263 = vmatprep.subr.mxu0 0.0
        %264 = vmatpush1.msra.mxu0 0.0
        %265 = vmatprep.subr.mxu0 0.0
        %266 = vmatpush1.msra.mxu0 0.0
        %267 = vmatprep.subr.mxu0 0.0
        %268 = vmatpush1.msra.mxu0 0.0
        %269 = vmatprep.subr.mxu0 0.0
        %270 = vmatpush1.msra.mxu0 0.0
        %271 = vmatprep.subr.mxu0 0.0
        %272 = vmatpush1.msra.mxu0 0.0
        %273 = vmatprep.subr.mxu0 %v249
        %274 = vmatpush1.msra.mxu0 %v246
        %275 = vmatprep.subr.mxu0 %v231
        %276 = vmatpush1.msra.mxu0 %v230
        %277 = vmatprep.subr.mxu0 %v229
        %278 = vmatpush1.msra.mxu0 %v228
        %279 = vmatprep.subr.mxu0 %v227
        %280 = vmatpush1.msra.mxu0 %v226
        %281 = vmatprep.subr.mxu0 %v225
        %282 = vmatpush1.msra.mxu0 %v224
        %283 = vmatprep.subr.mxu0 0.0
        %284 = vmatpush2.msra.mxu0 0.0
        %285 = vmatprep.subr.mxu0 0.0
        %286 = vmatpush2.msra.mxu0 0.0
        %287 = vmatprep.subr.mxu0 0.0
        %288 = vmatpush2.msra.mxu0 0.0
        %289 = vmatprep.subr.mxu0 0.0
        %290 = vmatpush2.msra.mxu0 0.0
        %291 = vmatprep.subr.mxu0 0.0
        %292 = vmatpush2.msra.mxu0 0.0
        %293 = vmatprep.subr.mxu0 0.0
        %294 = vmatpush2.msra.mxu0 0.0
        %295 = vmatprep.subr.mxu0 0.0
        %296 = vmatpush2.msra.mxu0 0.0
        %297 = vmatprep.subr.mxu0 0.0
        %298 = vmatpush2.msra.mxu0 0.0
        %299 = vmatprep.subr.mxu0 0.0
        %300 = vmatpush2.msra.mxu0 0.0
        %301 = vmatprep.subr.mxu0 0.0
        %302 = vmatpush2.msra.mxu0 0.0
        %303 = vmatprep.subr.mxu0 0.0
        %304 = vmatpush2.msra.mxu0 0.0
        %305 = vmatprep.subr.mxu0 0.0
        %306 = vmatpush2.msra.mxu0 0.0
        %307 = vmatprep.subr.mxu0 0.0
        %308 = vmatpush2.msra.mxu0 0.0
        %309 = vmatprep.subr.mxu0 0.0
        %310 = vmatpush2.msra.mxu0 0.0
        %311 = vmatprep.subr.mxu0 0.0
        %312 = vmatpush2.msra.mxu0 0.0
        %313 = vmatprep.subr.mxu0 0.0
        %314 = vmatpush2.msra.mxu0 0.0
        %315 = vmatprep.mubr.f32.mxu0 0.0
        %316 = vmatmul.mubr.f32.gmra.mxu0 %v242
        %v317 = vpop.f32.mrf.mxu0
        %v318 = vadd.f32 %v238, %v317
        %v319 = vpop.f32.mrf.mxu0
        %v320 = vadd.f32 %v238, %v319
        %321 = vdwg.mxu0
        %v322 = vadd.f32 %v318, %v320
        %323 = vadd.xlane.f32.xlu0 %v322
        %v324 = vpop.xlane.xlu0 %323
        %v325 = vmul.f32 %v318, %v318
        %v326 = vmul.f32 %v320, %v320
        %v327 = vadd.f32 %v325, %v326
        %328 = vadd.xlane.f32.xlu0 %v327
        %v329 = vpop.xlane.xlu0 %328
        %v330 = vrcp.pop 256.0
        %v331 = vmul.f32 %v324, %v330
        %v332 = vmul.f32 %v329, %v330
        %v333 = vmul.f32 %v331, %v331
        %v334 = vsub.f32 %v332, %v333
        %v335 = vmax.f32 %v334, 0.0
        %v336 = vadd.f32 %v335, 1e-05
        %v337 = vrsqrt.pop %v336
        %v338 = vsub.f32 %v318, %v331
        %v339 = vsub.f32 %v320, %v331
        %v340 = vld [vmem:[%s3] sm:$0xff]
        %v341 = vmul.f32 %v337, %v340
        %343 = vset.pattern.permute.xlu0 0
        %344 = vperm.xlu0 %343, %v341
        %v345 = vpop.permute.xlu0 %344
        %v347 = vmul.f32 %v338, %v345
        %v348 = vmul.f32 %v339, %v345
        %v349 = vld [vmem:[%s4] sm:$0xff]
        %351 = vset.pattern.permute.xlu0 0
        %352 = vperm.xlu0 %351, %v349
        %v353 = vpop.permute.xlu0 %352
        %v355 = vadd.f32 %v347, %v353
        %v356 = vadd.f32 %v348, %v353
        %v357 = vmin.f32 %v355, 20.0
        %v358 = vmin.f32 %v356, 20.0
        %v359 = vmul.f32 %v357, 1.442695
        %v360 = vpow.pop %v359
        %v361 = vmul.f32 %v358, 1.442695
        %v362 = vpow.pop %v361
        %v363 = vadd.f32 %v360, 2.0
        %v364 = vadd.f32 %v362, 2.0
        %v365 = vmul.f32 %v360, %v363
        %v366 = vmul.f32 %v362, %v364
        %v367 = vmul.f32 %v355, %v365
        %v368 = vmul.f32 %v356, %v366
        %v369 = vadd.f32 %v365, 2.0
        %v370 = vadd.f32 %v366, 2.0
        %v371 = vrcp.pop %v369
        %v372 = vrcp.pop %v370
        %v373 = vmul.f32 %v367, %v371
        %v374 = vmul.f32 %v368, %v372
        %vm375 = vcmp.gt.f32.partialorder %v355, 20.0
        %vm376 = vcmp.gt.f32.partialorder %v356, 20.0
        %v377 = vsel %vm375, %v355, %v373
        %v378 = vsel %vm376, %v356, %v374
        %379 = vst [vmem:[%s217] sm:$0xff] %v377
        %380 = vst [vmem:[%s217 + $0x8] sm:$0xff] %v378
        %s381 = sand.u32 %s137, 1
        %s382 = scalar_lea.sflag [#allocation3], %s381
        %s383 = sand.u32 %s137, 1
        %s384 = smul.addr %s383, 16
        %s385 = scalar_lea.vmem [#allocation2], %s384
        // Predicated region
        $region41: #{tpu_custom_call.1} parent=39 // pred_check
          %p386 = pneg %p147
        $region42: #{tpu_custom_call.1} parent=39 // pred_check_branch
          %388 = sbr.rel (%p386) target = $region44
        $region43: #{tpu_custom_call.1} parent=39 // pred_region
          %s390 = ssub.s32 256, 256
          %391 = vsyncadd %s382, %s390
          %s392 = smul.addr %s19, 2
          %s393 = smul.addr %s392, 128
          %s394 = scalar_lea.hbm %s5, %s393
          %s396 = sshll.u32 %s385, 4
          %s397 = int_to_ptr.vmem [resolvable:$true] %s396
          %399 = dma.vmem_to_hbm [thread:$0]  %s397, 256, %s394, %s382
        $region44: #{tpu_custom_call.1} parent=39 // pred_fallthru
          _
      $region40: #{tpu_custom_call.1} parent=5 // pred_fallthru
        _
      %p400 = scmp.le.s32.totalorder 2, %s14
      // Predicated region
      $region45: #{tpu_custom_call.1} parent=5 // pred_check
        %p401 = pneg %p400
      $region46: #{tpu_custom_call.1} parent=5 // pred_check_branch
        %403 = sbr.rel (%p401) target = $region48
      $region47: #{tpu_custom_call.1} parent=5 // pred_region
        %s404 = ssub.s32 %s14, 2
        // Predicated region
        $region49: #{tpu_custom_call.1} parent=47 // pred_check
          %p405 = pneg %p153
        $region50: #{tpu_custom_call.1} parent=47 // pred_check_branch
          %407 = sbr.rel (%p405) target = $region52
        $region51: #{tpu_custom_call.1} parent=47 // pred_region
          %s408 = sand.u32 %s138, 1
          %s409 = scalar_lea.sflag [#allocation3], %s408
          %s410 = sand.u32 %s138, 1
          %s411 = smul.addr %s410, 16
          %s412 = scalar_lea.vmem [#allocation2], %s411
          %413 = dma.done %s409, 256
        $region52: #{tpu_custom_call.1} parent=47 // pred_fallthru
          _
      $region48: #{tpu_custom_call.1} parent=5 // pred_fallthru
        _
    $region6: #{tpu_custom_call.1} parent=1 // loop_footer
      %s18 = sadd.s32 1, %s14
    $region7: #{tpu_custom_call.1} parent=1 // loop_footer_branch
      %13 = sbr.rel target = $region3
    $region8: #{tpu_custom_call.1} parent=1 // loop_exit
      _
    %414 = vsyncpa [#allocation3], 1
    %s415 = scalar_lea.sflag [#allocation3], 1
    %416 = vsyncpa %s415, 1

</llo_original>
